<compile_context>
chip_gen: v6e
topology: v6e:2x2x1
jax: 0.10.0
libtpu: 0.0.40
codegen_flags: <defaults>
</compile_context>

<pallas_src>
import functools

import jax
import jax.numpy as jnp
from jax.experimental import pallas as pl
from jax.experimental.pallas import tpu as pltpu

# Layer dims (nn.Linear(10,6) -> nn.Linear(6,3) -> nn.Linear(3,2)).
_D_IN, _D_H1, _D_H2, _D_OUT = 10, 6, 3, 2
_LANES = 128

# Packed parameter slab (single f32 array; every row start is 8-aligned so the
# in-kernel static slices never cross an (8,128) tile boundary).
# Weights stored in PyTorch layout (out_features, in_features); biases stored
# as column vectors so they broadcast over the lane (batch) axis in-kernel.
_W1_R, _W2_R, _W3_R = 0, 8, 16
_B1_R, _B2_R, _B3_R = 24, 32, 40
_SLAB_ROWS, _SLAB_COLS = 48, 16


def _cdiv(a, b):
    return -(-a // b)


def _round_up(n, m):
    return _cdiv(n, m) * m


def _mlp_kernel(x_ref, p_ref, o_ref):
    """Fused 3-layer MLP on one feature-major batch tile."""
    p = p_ref[...]
    w1 = p[_W1_R:_W1_R + _D_H1, :_D_IN]    # (6, 10)
    w2 = p[_W2_R:_W2_R + _D_H2, :_D_H1]    # (3, 6)
    w3 = p[_W3_R:_W3_R + _D_OUT, :_D_H2]   # (2, 3)
    b1 = p[_B1_R:_B1_R + _D_H1, :1]        # (6, 1)
    b2 = p[_B2_R:_B2_R + _D_H2, :1]        # (3, 1)
    b3 = p[_B3_R:_B3_R + _D_OUT, :1]       # (2, 1)

    x = x_ref[...]  # (10, tb) in the caller's dtype (f32 or bf16) -- no upcast.
    h = jnp.dot(w1.astype(x.dtype), x, preferred_element_type=jnp.float32)
    h = jnp.maximum(h + b1, 0.0)
    h = jnp.dot(w2, h, preferred_element_type=jnp.float32)
    h = jnp.maximum(h + b2, 0.0)
    y = jnp.dot(w3, h, preferred_element_type=jnp.float32) + b3
    o_ref[...] = y.astype(o_ref.dtype)     # (2, tb) lane-dense store


def pack_params(w1, b1, w2, b2, w3, b3):
    """Pack the 6 nn.Linear params (W: (out,in), b: (out,)) into one f32 slab."""
    p = jnp.zeros((_SLAB_ROWS, _SLAB_COLS), jnp.float32)
    p = p.at[_W1_R:_W1_R + _D_H1, :_D_IN].set(w1.astype(jnp.float32))
    p = p.at[_W2_R:_W2_R + _D_H2, :_D_H1].set(w2.astype(jnp.float32))
    p = p.at[_W3_R:_W3_R + _D_OUT, :_D_H2].set(w3.astype(jnp.float32))
    p = p.at[_B1_R:_B1_R + _D_H1, 0].set(b1.reshape(-1).astype(jnp.float32))
    p = p.at[_B2_R:_B2_R + _D_H2, 0].set(b2.reshape(-1).astype(jnp.float32))
    p = p.at[_B3_R:_B3_R + _D_OUT, 0].set(b3.reshape(-1).astype(jnp.float32))
    return p


@functools.partial(jax.jit, static_argnames=("tile_b",))
def simple_nn_forward_fm(x_fm, param_slab, *, tile_b=65536):
    """Feature-major entry point: x_fm is (10, B); returns (2, B)."""
    d, b = x_fm.shape
    if d != _D_IN:
        raise ValueError(f"expected x_fm of shape (10, B), got {x_fm.shape}")

    # Balance the batch over tiles; tb is a multiple of 128 (lane axis), so
    # padding waste is < 128 rows regardless of dtype (no sublane constraint
    # on the batch axis in this layout).
    n_tiles = _cdiv(b, max(int(tile_b), _LANES))
    tb = _round_up(_cdiv(b, n_tiles), _LANES)
    b_pad = tb * n_tiles
    x_p = x_fm if b_pad == b else jnp.pad(x_fm, ((0, 0), (0, b_pad - b)))

    flops = 2 * b_pad * (_D_IN * _D_H1 + _D_H1 * _D_H2 + _D_H2 * _D_OUT)
    bytes_accessed = (b_pad * _D_IN * x_fm.dtype.itemsize
                      + b_pad * _D_OUT * x_fm.dtype.itemsize
                      + param_slab.size * param_slab.dtype.itemsize)

    out = pl.pallas_call(
        _mlp_kernel,
        out_shape=jax.ShapeDtypeStruct((_D_OUT, b_pad), x_fm.dtype),
        grid=(n_tiles,),
        in_specs=[
            # x tile: full feature dim (10 rows), tb batch lanes.  Default
            # double buffering; the DMA hides under the previous step at this
            # tile size (only deepen to Buffered(3) if a profile shows exposed
            # input DMA).
            pl.BlockSpec((_D_IN, tb), lambda i: (0, i)),
            # Parameter slab: constant index_map keeps it resident in VMEM for
            # the whole grid; a single buffer suffices since the block never
            # changes.
            pl.BlockSpec((_SLAB_ROWS, _SLAB_COLS), lambda i: (0, 0),
                         pipeline_mode=pl.Buffered(1)),
        ],
        # Lane-dense output tile: full-lane vst, no masked partial stores.
        out_specs=pl.BlockSpec((_D_OUT, tb), lambda i: (0, i)),
        compiler_params=pltpu.CompilerParams(
            # TODO(synk): profile on v7x; plain "parallel" may leave one
            # TensorCore idle -- switch to pltpu.CORE_PARALLEL (or an explicit
            # 2-wide leading grid axis) if one TC idles.
            dimension_semantics=("parallel",),
            # Above v5e's 16 MiB scoped default, comfortably under v7x's
            # 64 MiB physical VMEM; default tb=65536/f32 uses ~12 MiB.
            vmem_limit_bytes=48 * 1024 * 1024,
        ),
        cost_estimate=pl.CostEstimate(
            flops=flops, transcendentals=0, bytes_accessed=bytes_accessed),
    )(x_p, param_slab)
    return out[:, :b]


@functools.partial(jax.jit, static_argnames=("tile_b",))
def simple_nn_forward(x, param_slab, *, tile_b=65536):
    """PyTorch-layout entry point: x is (B, 10); returns (B, 2).

    The transposes happen once here (fused by XLA); callers able to keep
    activations feature-major should use simple_nn_forward_fm directly.
    """
    return simple_nn_forward_fm(x.T, param_slab, tile_b=tile_b).T


def init_params(key, dtype=jnp.float32):
    """Deterministic init matching nn.Linear: W (out,in), b (out,), U(+-1/sqrt(fan_in))."""
    dims = [(_D_H1, _D_IN), (_D_H2, _D_H1), (_D_OUT, _D_H2)]
    params = []
    for fan_out, fan_in in dims:
        key, kw, kb = jax.random.split(key, 3)
        bound = 1.0 / float(fan_in) ** 0.5
        w = jax.random.uniform(kw, (fan_out, fan_in), dtype, -bound, bound)
        b = jax.random.uniform(kb, (fan_out,), dtype, -bound, bound)
        params += [w, b]
    return tuple(params)


def _reference_forward(x, params):
    w1, b1, w2, b2, w3, b3 = params  # PyTorch layout: W (out, in)
    h = jnp.maximum(x @ w1.T + b1, 0.0)
    h = jnp.maximum(h @ w2.T + b2, 0.0)
    return h @ w3.T + b3


if __name__ == "__main__":
    key = jax.random.PRNGKey(0)
    k_params, k_x, k_x2 = jax.random.split(key, 3)

    params = init_params(k_params)
    slab = pack_params(*params)

    # Small f32 example (single tile).
    batch = 8
    x = jax.random.normal(k_x, (batch, _D_IN), dtype=jnp.float32)
    out = jax.block_until_ready(simple_nn_forward(x, slab))
    ref = _reference_forward(x, params)
    assert out.shape == (batch, _D_OUT), out.shape
    assert jnp.allclose(out, ref, atol=1e-4, rtol=1e-4), "f32 mismatch vs reference"

    # Multi-tile grid check (batch balanced over 3 tiles of 128).
    batch2 = 300
    x2 = jax.random.normal(k_x2, (batch2, _D_IN), dtype=jnp.float32)
    out2 = jax.block_until_ready(simple_nn_forward(x2, slab, tile_b=128))
    ref2 = _reference_forward(x2, params)
    assert out2.shape == (batch2, _D_OUT), out2.shape
    assert jnp.allclose(out2, ref2, atol=1e-4, rtol=1e-4), "multi-tile mismatch"

    # bf16 input path: halves x HBM traffic; MXU takes bf16 in with f32 acc.
    x_bf16 = x.astype(jnp.bfloat16)
    out_bf16 = jax.block_until_ready(simple_nn_forward(x_bf16, slab))
    assert out_bf16.shape == (batch, _D_OUT), out_bf16.shape
    assert out_bf16.dtype == jnp.bfloat16
    assert jnp.allclose(out_bf16.astype(jnp.float32), ref, atol=5e-2, rtol=5e-2), \
        "bf16 mismatch vs reference"

    print("KERNEL_OK")
</pallas_src>

<mosaic_0001>
module attributes {stable_mosaic.version = 11 : i64} {
  func.func @_mlp_kernel(%arg0: i32, %arg1: memref<10x128xf32, #tpu.memory_space<vmem>>, %arg2: memref<48x16xf32, #tpu.memory_space<vmem>>, %arg3: memref<2x128xf32, #tpu.memory_space<vmem>>) attributes {dimension_semantics = [#tpu.dimension_semantics<parallel>], iteration_bounds = array<i64: 1>, scalar_prefetch = 0 : i64, scratch_operands = 0 : i64, tpu.core_type = #tpu.core_type<tc>, window_params = [{transform_indices = @transform_0, window_bounds = array<i64: 10, 128>}, {pipeline_mode = #tpu.pipeline_mode<synchronous>, transform_indices = @transform_1, window_bounds = array<i64: 48, 16>}, {transform_indices = @transform_2, window_bounds = array<i64: 2, 128>}]} {
    %c0 = arith.constant 0 : index
    %c0_0 = arith.constant 0 : index
    %0 = vector.load %arg2[%c0, %c0_0] : memref<48x16xf32, #tpu.memory_space<vmem>>, vector<48x16xf32>
    %1 = vector.extract_strided_slice %0 {offsets = [0, 0], sizes = [6, 10], strides = [1, 1]} : vector<48x16xf32> to vector<6x10xf32>
    %2 = vector.extract_strided_slice %0 {offsets = [8, 0], sizes = [3, 6], strides = [1, 1]} : vector<48x16xf32> to vector<3x6xf32>
    %3 = vector.extract_strided_slice %0 {offsets = [16, 0], sizes = [2, 3], strides = [1, 1]} : vector<48x16xf32> to vector<2x3xf32>
    %4 = vector.extract_strided_slice %0 {offsets = [24, 0], sizes = [6, 1], strides = [1, 1]} : vector<48x16xf32> to vector<6x1xf32>
    %5 = vector.extract_strided_slice %0 {offsets = [32, 0], sizes = [3, 1], strides = [1, 1]} : vector<48x16xf32> to vector<3x1xf32>
    %6 = vector.extract_strided_slice %0 {offsets = [40, 0], sizes = [2, 1], strides = [1, 1]} : vector<48x16xf32> to vector<2x1xf32>
    %c0_1 = arith.constant 0 : index
    %c0_2 = arith.constant 0 : index
    %7 = vector.load %arg1[%c0_1, %c0_2] : memref<10x128xf32, #tpu.memory_space<vmem>>, vector<10x128xf32>
    %cst = arith.constant dense<0.000000e+00> : vector<6x128xf32>
    %8 = tpu.matmul %1, %7, %cst {dimension_numbers = #tpu.dot_dimension_numbers<[1], [0], [0], [1], [0, 0, 1, 1], [], []>} : vector<6x10xf32>, vector<10x128xf32>, vector<6x128xf32> -> vector<6x128xf32>
    %9 = vector.broadcast %4 : vector<6x1xf32> to vector<6x128xf32>
    %10 = arith.addf %8, %9 : vector<6x128xf32>
    %cst_3 = arith.constant 0.000000e+00 : f32
    %11 = vector.broadcast %cst_3 : f32 to vector<6x128xf32>
    %12 = arith.maximumf %10, %11 : vector<6x128xf32>
    %cst_4 = arith.constant dense<0.000000e+00> : vector<3x128xf32>
    %13 = tpu.matmul %2, %12, %cst_4 {dimension_numbers = #tpu.dot_dimension_numbers<[1], [0], [0], [1], [0, 0, 1, 1], [], []>} : vector<3x6xf32>, vector<6x128xf32>, vector<3x128xf32> -> vector<3x128xf32>
    %14 = vector.broadcast %5 : vector<3x1xf32> to vector<3x128xf32>
    %15 = arith.addf %13, %14 : vector<3x128xf32>
    %cst_5 = arith.constant 0.000000e+00 : f32
    %16 = vector.broadcast %cst_5 : f32 to vector<3x128xf32>
    %17 = arith.maximumf %15, %16 : vector<3x128xf32>
    %cst_6 = arith.constant dense<0.000000e+00> : vector<2x128xf32>
    %18 = tpu.matmul %3, %17, %cst_6 {dimension_numbers = #tpu.dot_dimension_numbers<[1], [0], [0], [1], [0, 0, 1, 1], [], []>} : vector<2x3xf32>, vector<3x128xf32>, vector<2x128xf32> -> vector<2x128xf32>
    %19 = vector.broadcast %6 : vector<2x1xf32> to vector<2x128xf32>
    %20 = arith.addf %18, %19 : vector<2x128xf32>
    %c0_7 = arith.constant 0 : index
    %c0_8 = arith.constant 0 : index
    %21 = vector.load %arg3[%c0_7, %c0_8] : memref<2x128xf32, #tpu.memory_space<vmem>>, vector<2x128xf32>
    tpu.vector_store %arg3[%c0_7, %c0_8], %20 {strides = array<i32>} : memref<2x128xf32, #tpu.memory_space<vmem>>, vector<2x128xf32>,
    return
  }
  func.func @transform_0(%arg0: i32) -> (i32, i32) {
    %c0_i32 = arith.constant 0 : i32
    %c0_i32_0 = arith.constant 0 : i32
    return %c0_i32, %arg0 : i32, i32
  }
  func.func @transform_1(%arg0: i32) -> (i32, i32) {
    %c0_i32 = arith.constant 0 : i32
    %c0_i32_0 = arith.constant 0 : i32
    %c0_i32_1 = arith.constant 0 : i32
    return %c0_i32, %c0_i32_0 : i32, i32
  }
  func.func @transform_2(%arg0: i32) -> (i32, i32) {
    %c0_i32 = arith.constant 0 : i32
    %c0_i32_0 = arith.constant 0 : i32
    return %c0_i32, %arg0 : i32, i32
  }
}

</mosaic_0001>

<llo_original>
// kernel: simple_nn_forward_fm.1
$region0: #{simple_nn_forward_fm.1}
  #allocation0 [shape = 'u32[]', space=smem, size = 0x4, offset = 0x4, fixed_abs, tag = 'smem constant byte address 0x4 - core index']
  #allocation1 [shape = 'u32[144,128]{1,0:T(1,128)}', space=vmem, size = 0x12000, scoped, tag = 'internal scratch']
  %s0 = inlined_call_operand.vmem [shape: f32[10,128], index: 0, kind: input, shape index: {}]
  %s1 = inlined_call_operand.vmem [shape: f32[48,16], index: 1, kind: input, shape index: {}]
  %s2 = inlined_call_operand.hbm [shape: f32[2,128], index: 2, kind: output, shape index: {}]
  %s3 = sld [smem:[#allocation0]]
  $region18: #{simple_nn_forward_fm.1} parent=0
    _
  %s5 = ssub.s32 1, %s3
  %s6 = scalar_select 0, %s5, %s3
  $region1: #{simple_nn_forward_fm.1} parent=0
    #allocation2 [shape = 'u8[1024]{0}', space=vmem, size = 0x400, scoped, tag = 'output window, operand 0, single buffered']
    #allocation3 [shape = 's32[1]{0}', space=sflag, size = 0x4, scoped, tag = 'scoped memory for simple_nn_forward_fm.1']
    %7 = vsyncpa [#allocation3], 0
    // Predicated region
    $region2: #{simple_nn_forward_fm.1} parent=1 // pred_check
      _
    $region3: #{simple_nn_forward_fm.1} parent=1 // pred_check_branch
      %9 = sbr.rel (0) target = $region5
    $region4: #{simple_nn_forward_fm.1} parent=1 // pred_region
      _
    $region5: #{simple_nn_forward_fm.1} parent=1 // pred_fallthru
      _
    // Predicated region
    $region6: #{simple_nn_forward_fm.1} parent=1 // pred_check
      _
    $region7: #{simple_nn_forward_fm.1} parent=1 // pred_check_branch
      %11 = sbr.rel (0) target = $region9
    $region8: #{simple_nn_forward_fm.1} parent=1 // pred_region
      _
    $region9: #{simple_nn_forward_fm.1} parent=1 // pred_fallthru
      _
    %v12 = vld [vmem:[%s1] sm:$0xff]
    %v13 = vld [vmem:[%s1 + $0x8] sm:$0xff]
    %v14 = vld [vmem:[%s1 + $0x10] sm:$0xff]
    %v15 = vld [vmem:[%s1 + $0x18] sm:$0xff]
    %v16 = vld [vmem:[%s1 + $0x20] sm:$0xff]
    %v17 = vld [vmem:[%s1 + $0x28] sm:$0xff]
    %v18 = vld [vmem:[%s0] sm:$0xff]
    %v19 = vld [vmem:[%s0 + $0x8] sm:$0x3]
    %21 = vset.pattern.permute.xlu0 0
    %22 = vperm.xlu0 %21, %v15
    %v23 = vpop.permute.xlu0 %22
    %vm25 = vcmask 80896
    %v27 = vsel %vm25, %v12, 0
    %vm29 = vcmask 1041408
    %v31 = vsel %vm29, %v19, 0
    %33 = vmatprep.subr.mxu0 0.0
    %34 = vmatpush1.msra.mxu0 0.0
    %35 = vmatprep.subr.mxu0 0.0
    %36 = vmatpush1.msra.mxu0 0.0
    %37 = vmatprep.subr.mxu0 0.0
    %38 = vmatpush1.msra.mxu0 0.0
    %39 = vmatprep.subr.mxu0 0.0
    %40 = vmatpush1.msra.mxu0 0.0
    %41 = vmatprep.subr.mxu0 0.0
    %42 = vmatpush1.msra.mxu0 0.0
    %43 = vmatprep.subr.mxu0 0.0
    %44 = vmatpush1.msra.mxu0 0.0
    %45 = vmatprep.subr.mxu0 0.0
    %46 = vmatpush1.msra.mxu0 0.0
    %47 = vmatprep.subr.mxu0 0.0
    %48 = vmatpush1.msra.mxu0 0.0
    %49 = vmatprep.subr.mxu0 0.0
    %50 = vmatpush1.msra.mxu0 0.0
    %51 = vmatprep.subr.mxu0 0.0
    %52 = vmatpush1.msra.mxu0 0.0
    %53 = vmatprep.subr.mxu0 0.0
    %54 = vmatpush1.msra.mxu0 0.0
    %55 = vmatprep.subr.mxu0 0.0
    %56 = vmatpush1.msra.mxu0 0.0
    %57 = vmatprep.subr.mxu0 0.0
    %58 = vmatpush1.msra.mxu0 0.0
    %59 = vmatprep.subr.mxu0 0.0
    %60 = vmatpush1.msra.mxu0 0.0
    %61 = vmatprep.subr.mxu0 0.0
    %62 = vmatpush1.msra.mxu0 %v31
    %63 = vmatprep.subr.mxu0 0.0
    %64 = vmatpush1.msra.mxu0 %v18
    %65 = vmatprep.subr.mxu0 0.0
    %66 = vmatpush2.msra.mxu0 0.0
    %67 = vmatprep.subr.mxu0 0.0
    %68 = vmatpush2.msra.mxu0 0.0
    %69 = vmatprep.subr.mxu0 0.0
    %70 = vmatpush2.msra.mxu0 0.0
    %71 = vmatprep.subr.mxu0 0.0
    %72 = vmatpush2.msra.mxu0 0.0
    %73 = vmatprep.subr.mxu0 0.0
    %74 = vmatpush2.msra.mxu0 0.0
    %75 = vmatprep.subr.mxu0 0.0
    %76 = vmatpush2.msra.mxu0 0.0
    %77 = vmatprep.subr.mxu0 0.0
    %78 = vmatpush2.msra.mxu0 0.0
    %79 = vmatprep.subr.mxu0 0.0
    %80 = vmatpush2.msra.mxu0 0.0
    %81 = vmatprep.subr.mxu0 0.0
    %82 = vmatpush2.msra.mxu0 0.0
    %83 = vmatprep.subr.mxu0 0.0
    %84 = vmatpush2.msra.mxu0 0.0
    %85 = vmatprep.subr.mxu0 0.0
    %86 = vmatpush2.msra.mxu0 0.0
    %87 = vmatprep.subr.mxu0 0.0
    %88 = vmatpush2.msra.mxu0 0.0
    %89 = vmatprep.subr.mxu0 0.0
    %90 = vmatpush2.msra.mxu0 0.0
    %91 = vmatprep.subr.mxu0 0.0
    %92 = vmatpush2.msra.mxu0 0.0
    %93 = vmatprep.subr.mxu0 0.0
    %94 = vmatpush2.msra.mxu0 0.0
    %95 = vmatprep.subr.mxu0 0.0
    %96 = vmatpush2.msra.mxu0 0.0
    %97 = vmatprep.mubr.f32.mxu0 0.0
    %98 = vmatmul.mubr.f32.gmra.mxu0 %v27
    %v99 = vpop.f32.mrf.mxu0
    %v100 = vadd.f32 %v23, %v99
    %v101 = vpop.f32.mrf.mxu0
    %102 = vdwg.mxu0
    %v103 = vmax.f32 %v100, 0.0
    %105 = vset.pattern.permute.xlu0 0
    %106 = vperm.xlu0 %105, %v16
    %v107 = vpop.permute.xlu0 %106
    %vm109 = vcmask 48128
    %v111 = vsel %vm109, %v13, 0
    %vm113 = vcmask 1045504
    %v115 = vsel %vm113, %v103, 0
    %117 = vmatprep.subr.mxu0 0.0
    %118 = vmatpush1.msra.mxu0 0.0
    %119 = vmatprep.subr.mxu0 0.0
    %120 = vmatpush1.msra.mxu0 0.0
    %121 = vmatprep.subr.mxu0 0.0
    %122 = vmatpush1.msra.mxu0 0.0
    %123 = vmatprep.subr.mxu0 0.0
    %124 = vmatpush1.msra.mxu0 0.0
    %125 = vmatprep.subr.mxu0 0.0
    %126 = vmatpush1.msra.mxu0 0.0
    %127 = vmatprep.subr.mxu0 0.0
    %128 = vmatpush1.msra.mxu0 0.0
    %129 = vmatprep.subr.mxu0 0.0
    %130 = vmatpush1.msra.mxu0 0.0
    %131 = vmatprep.subr.mxu0 0.0
    %132 = vmatpush1.msra.mxu0 0.0
    %133 = vmatprep.subr.mxu0 0.0
    %134 = vmatpush1.msra.mxu0 0.0
    %135 = vmatprep.subr.mxu0 0.0
    %136 = vmatpush1.msra.mxu0 0.0
    %137 = vmatprep.subr.mxu0 0.0
    %138 = vmatpush1.msra.mxu0 0.0
    %139 = vmatprep.subr.mxu0 0.0
    %140 = vmatpush1.msra.mxu0 0.0
    %141 = vmatprep.subr.mxu0 0.0
    %142 = vmatpush1.msra.mxu0 0.0
    %143 = vmatprep.subr.mxu0 0.0
    %144 = vmatpush1.msra.mxu0 0.0
    %145 = vmatprep.subr.mxu0 0.0
    %146 = vmatpush1.msra.mxu0 0.0
    %147 = vmatprep.subr.mxu0 0.0
    %148 = vmatpush1.msra.mxu0 %v115
    %149 = vmatprep.subr.mxu0 0.0
    %150 = vmatpush2.msra.mxu0 0.0
    %151 = vmatprep.subr.mxu0 0.0
    %152 = vmatpush2.msra.mxu0 0.0
    %153 = vmatprep.subr.mxu0 0.0
    %154 = vmatpush2.msra.mxu0 0.0
    %155 = vmatprep.subr.mxu0 0.0
    %156 = vmatpush2.msra.mxu0 0.0
    %157 = vmatprep.subr.mxu0 0.0
    %158 = vmatpush2.msra.mxu0 0.0
    %159 = vmatprep.subr.mxu0 0.0
    %160 = vmatpush2.msra.mxu0 0.0
    %161 = vmatprep.subr.mxu0 0.0
    %162 = vmatpush2.msra.mxu0 0.0
    %163 = vmatprep.subr.mxu0 0.0
    %164 = vmatpush2.msra.mxu0 0.0
    %165 = vmatprep.subr.mxu0 0.0
    %166 = vmatpush2.msra.mxu0 0.0
    %167 = vmatprep.subr.mxu0 0.0
    %168 = vmatpush2.msra.mxu0 0.0
    %169 = vmatprep.subr.mxu0 0.0
    %170 = vmatpush2.msra.mxu0 0.0
    %171 = vmatprep.subr.mxu0 0.0
    %172 = vmatpush2.msra.mxu0 0.0
    %173 = vmatprep.subr.mxu0 0.0
    %174 = vmatpush2.msra.mxu0 0.0
    %175 = vmatprep.subr.mxu0 0.0
    %176 = vmatpush2.msra.mxu0 0.0
    %177 = vmatprep.subr.mxu0 0.0
    %178 = vmatpush2.msra.mxu0 0.0
    %179 = vmatprep.subr.mxu0 0.0
    %180 = vmatpush2.msra.mxu0 0.0
    %181 = vmatprep.mubr.f32.mxu0 0.0
    %182 = vmatmul.mubr.f32.gmra.mxu0 %v111
    %v183 = vpop.f32.mrf.mxu0
    %v184 = vadd.f32 %v107, %v183
    %v185 = vpop.f32.mrf.mxu0
    %186 = vdwg.mxu0
    %v187 = vmax.f32 %v184, 0.0
    %189 = vset.pattern.permute.xlu0 0
    %190 = vperm.xlu0 %189, %v17
    %v191 = vpop.permute.xlu0 %190
    %vm193 = vcmask 23552
    %v195 = vsel %vm193, %v14, 0
    %vm197 = vcmask 1042432
    %v199 = vsel %vm197, %v187, 0
    %201 = vmatprep.subr.mxu0 0.0
    %202 = vmatpush1.msra.mxu0 0.0
    %203 = vmatprep.subr.mxu0 0.0
    %204 = vmatpush1.msra.mxu0 0.0
    %205 = vmatprep.subr.mxu0 0.0
    %206 = vmatpush1.msra.mxu0 0.0
    %207 = vmatprep.subr.mxu0 0.0
    %208 = vmatpush1.msra.mxu0 0.0
    %209 = vmatprep.subr.mxu0 0.0
    %210 = vmatpush1.msra.mxu0 0.0
    %211 = vmatprep.subr.mxu0 0.0
    %212 = vmatpush1.msra.mxu0 0.0
    %213 = vmatprep.subr.mxu0 0.0
    %214 = vmatpush1.msra.mxu0 0.0
    %215 = vmatprep.subr.mxu0 0.0
    %216 = vmatpush1.msra.mxu0 0.0
    %217 = vmatprep.subr.mxu0 0.0
    %218 = vmatpush1.msra.mxu0 0.0
    %219 = vmatprep.subr.mxu0 0.0
    %220 = vmatpush1.msra.mxu0 0.0
    %221 = vmatprep.subr.mxu0 0.0
    %222 = vmatpush1.msra.mxu0 0.0
    %223 = vmatprep.subr.mxu0 0.0
    %224 = vmatpush1.msra.mxu0 0.0
    %225 = vmatprep.subr.mxu0 0.0
    %226 = vmatpush1.msra.mxu0 0.0
    %227 = vmatprep.subr.mxu0 0.0
    %228 = vmatpush1.msra.mxu0 0.0
    %229 = vmatprep.subr.mxu0 0.0
    %230 = vmatpush1.msra.mxu0 0.0
    %231 = vmatprep.subr.mxu0 0.0
    %232 = vmatpush1.msra.mxu0 %v199
    %233 = vmatprep.subr.mxu0 0.0
    %234 = vmatpush2.msra.mxu0 0.0
    %235 = vmatprep.subr.mxu0 0.0
    %236 = vmatpush2.msra.mxu0 0.0
    %237 = vmatprep.subr.mxu0 0.0
    %238 = vmatpush2.msra.mxu0 0.0
    %239 = vmatprep.subr.mxu0 0.0
    %240 = vmatpush2.msra.mxu0 0.0
    %241 = vmatprep.subr.mxu0 0.0
    %242 = vmatpush2.msra.mxu0 0.0
    %243 = vmatprep.subr.mxu0 0.0
    %244 = vmatpush2.msra.mxu0 0.0
    %245 = vmatprep.subr.mxu0 0.0
    %246 = vmatpush2.msra.mxu0 0.0
    %247 = vmatprep.subr.mxu0 0.0
    %248 = vmatpush2.msra.mxu0 0.0
    %249 = vmatprep.subr.mxu0 0.0
    %250 = vmatpush2.msra.mxu0 0.0
    %251 = vmatprep.subr.mxu0 0.0
    %252 = vmatpush2.msra.mxu0 0.0
    %253 = vmatprep.subr.mxu0 0.0
    %254 = vmatpush2.msra.mxu0 0.0
    %255 = vmatprep.subr.mxu0 0.0
    %256 = vmatpush2.msra.mxu0 0.0
    %257 = vmatprep.subr.mxu0 0.0
    %258 = vmatpush2.msra.mxu0 0.0
    %259 = vmatprep.subr.mxu0 0.0
    %260 = vmatpush2.msra.mxu0 0.0
    %261 = vmatprep.subr.mxu0 0.0
    %262 = vmatpush2.msra.mxu0 0.0
    %263 = vmatprep.subr.mxu0 0.0
    %264 = vmatpush2.msra.mxu0 0.0
    %265 = vmatprep.mubr.f32.mxu0 0.0
    %266 = vmatmul.mubr.f32.gmra.mxu0 %v195
    %v267 = vpop.f32.mrf.mxu0
    %v268 = vadd.f32 %v191, %v267
    %v269 = vpop.f32.mrf.mxu0
    %270 = vdwg.mxu0
    %271 = vst [vmem:[#allocation2] sm:$0x3] %v268
    // Predicated region
    $region10: #{simple_nn_forward_fm.1} parent=1 // pred_check
      _
    $region11: #{simple_nn_forward_fm.1} parent=1 // pred_check_branch
      %273 = sbr.rel (0) target = $region13
    $region12: #{simple_nn_forward_fm.1} parent=1 // pred_region
      %s275 = ssub.s32 32, 32
      %276 = vsyncadd [#allocation3], %s275
      %s278 = sshll.u32 [#allocation2], 4
      %s279 = int_to_ptr.vmem [resolvable:$true] %s278
      %281 = dma.vmem_to_hbm [thread:$0]  %s279, 32, %s2, [#allocation3]
    $region13: #{simple_nn_forward_fm.1} parent=1 // pred_fallthru
      _
    // Predicated region
    $region14: #{simple_nn_forward_fm.1} parent=1 // pred_check
      _
    $region15: #{simple_nn_forward_fm.1} parent=1 // pred_check_branch
      %283 = sbr.rel (0) target = $region17
    $region16: #{simple_nn_forward_fm.1} parent=1 // pred_region
      %284 = dma.done [#allocation3], 32
    $region17: #{simple_nn_forward_fm.1} parent=1 // pred_fallthru
      _
    %285 = vsyncpa [#allocation3], 1

</llo_original>
